<compile_context>
chip_gen: v7x
topology: tpu7x:2x2x1
jax: 0.10.0
libtpu: 0.0.40
codegen_flags: <defaults>
</compile_context>

<pallas_src>
import jax
import jax.numpy as jnp
from jax.experimental import pallas as pl
from jax.experimental.pallas import tpu as pltpu


def rnn_kernel(x_ref, wih_ref, whh_ref, brnn_ref, wfc_ref, bfc_ref, out_ref):
    T, B, I = x_ref.shape          # time-major input
    H = whh_ref.shape[0]

    x = x_ref[...]                 # (T, B, I)
    w_ih_t = wih_ref[...]          # (I, H)  == W_ih^T
    w_hh_t = whh_ref[...]          # (H, H)  == W_hh^T

    # Input projection + fused bias, hoisted out of the recurrence: one batched
    # MXU matmul for all T steps, one broadcast add. Off the critical chain.
    xw = (
        jnp.einsum("tbi,ih->tbh", x, w_ih_t, preferred_element_type=jnp.float32)
        + brnn_ref[...]            # (1, 1, H) -> (T, B, H)
    )

    # Serial recurrence: minimal per-step work ((B,H)x(H,H) matmul + tanh).
    # T is a small static constant -> fully unrolled.
    h = jnp.zeros((B, H), jnp.float32)
    for t in range(T):
        h = jnp.tanh(
            xw[t] + jnp.dot(h, w_hh_t, preferred_element_type=jnp.float32)
        )

    # Final fc on the last hidden state, once, after the loop.
    y = jnp.dot(h, wfc_ref[...], preferred_element_type=jnp.float32) + bfc_ref[...]
    out_ref[...] = y.astype(out_ref.dtype)


def my_rnn_forward(x, w_ih, w_hh, b_ih, b_hh, w_fc, b_fc):
    """x: (B, T, I) float32 (PyTorch batch_first layout). Returns (B, O)."""
    B, T, I = x.shape
    H = w_ih.shape[0]
    O = w_fc.shape[0]

    # Host-side, one-time prep:
    x_tm = jnp.transpose(x, (1, 0, 2))          # (T, B, I) time-major
    w_ih_t = w_ih.T                             # (I, H)
    w_hh_t = w_hh.T                             # (H, H)
    b_rnn = (b_ih + b_hh).reshape(1, 1, H)      # fused RNN bias, broadcast-ready
    w_fc_t = w_fc.T                             # (H, O)
    b_fc2 = b_fc.reshape(1, O)

    vmem = pl.BlockSpec(memory_space=pltpu.MemorySpace.VMEM)
    return pl.pallas_call(
        rnn_kernel,
        out_shape=jax.ShapeDtypeStruct((B, O), jnp.float32),
        in_specs=[vmem] * 6,                    # whole arrays resident in VMEM
        out_specs=vmem,
    )(x_tm, w_ih_t, w_hh_t, b_rnn, w_fc_t, b_fc2)


def reference_forward(x, w_ih, w_hh, b_ih, b_hh, w_fc, b_fc):
    B, T, I = x.shape
    H = w_ih.shape[0]
    h = jnp.zeros((B, H), jnp.float32)
    for t in range(T):
        h = jnp.tanh(x[:, t, :] @ w_ih.T + b_ih + h @ w_hh.T + b_hh)
    return h @ w_fc.T + b_fc


if __name__ == "__main__":
    # Small shapes consistent with the module's forward.
    B, T, I, H, O = 2, 8, 16, 32, 8

    key = jax.random.PRNGKey(0)
    keys = jax.random.split(key, 8)
    # PyTorch-style deterministic init: U(-1/sqrt(H), 1/sqrt(H))
    bound = 1.0 / jnp.sqrt(jnp.float32(H))
    x = jax.random.normal(keys[0], (B, T, I), jnp.float32)
    w_ih = jax.random.uniform(keys[1], (H, I), jnp.float32, -bound, bound)
    w_hh = jax.random.uniform(keys[2], (H, H), jnp.float32, -bound, bound)
    b_ih = jax.random.uniform(keys[3], (H,), jnp.float32, -bound, bound)
    b_hh = jax.random.uniform(keys[4], (H,), jnp.float32, -bound, bound)
    w_fc = jax.random.uniform(keys[5], (O, H), jnp.float32, -bound, bound)
    b_fc = jax.random.uniform(keys[6], (O,), jnp.float32, -bound, bound)

    out = my_rnn_forward(x, w_ih, w_hh, b_ih, b_hh, w_fc, b_fc)
    out = jax.block_until_ready(out)

    ref = reference_forward(x, w_ih, w_hh, b_ih, b_hh, w_fc, b_fc)
    assert out.shape == (B, O)
    assert jnp.allclose(out, ref, atol=1e-5, rtol=1e-5), "mismatch vs reference"

    print("KERNEL_OK")
</pallas_src>

<mosaic_0001>
module attributes {stable_mosaic.version = 11 : i64} {
  func.func @rnn_kernel(%arg0: memref<8x2x16xf32, #tpu.memory_space<vmem>>, %arg1: memref<16x32xf32, #tpu.memory_space<vmem>>, %arg2: memref<32x32xf32, #tpu.memory_space<vmem>>, %arg3: memref<1x1x32xf32, #tpu.memory_space<vmem>>, %arg4: memref<32x8xf32, #tpu.memory_space<vmem>>, %arg5: memref<1x8xf32, #tpu.memory_space<vmem>>, %arg6: memref<2x8xf32, #tpu.memory_space<vmem>>) attributes {dimension_semantics = [], scalar_prefetch = 0 : i64, scratch_operands = 0 : i64, tpu.core_type = #tpu.core_type<tc>} {
    %c0 = arith.constant 0 : index
    %c0_0 = arith.constant 0 : index
    %c0_1 = arith.constant 0 : index
    %0 = vector.load %arg0[%c0, %c0_0, %c0_1] : memref<8x2x16xf32, #tpu.memory_space<vmem>>, vector<8x2x16xf32>
    %c0_2 = arith.constant 0 : index
    %c0_3 = arith.constant 0 : index
    %1 = vector.load %arg1[%c0_2, %c0_3] : memref<16x32xf32, #tpu.memory_space<vmem>>, vector<16x32xf32>
    %c0_4 = arith.constant 0 : index
    %c0_5 = arith.constant 0 : index
    %2 = vector.load %arg2[%c0_4, %c0_5] : memref<32x32xf32, #tpu.memory_space<vmem>>, vector<32x32xf32>
    "tpu.trace_start"() <{level = 10 : i32, message = "tbi,ih->tbh"}> : () -> ()
    %cst = arith.constant dense<0.000000e+00> : vector<8x2x32xf32>
    %3 = tpu.matmul %0, %1, %cst {dimension_numbers = #tpu.dot_dimension_numbers<[2], [0], [0, 1], [1], [0, 0, 0, 1, 1, 1], [], []>} : vector<8x2x16xf32>, vector<16x32xf32>, vector<8x2x32xf32> -> vector<8x2x32xf32>
    "tpu.trace_stop"() : () -> ()
    %c0_6 = arith.constant 0 : index
    %c0_7 = arith.constant 0 : index
    %c0_8 = arith.constant 0 : index
    %4 = vector.load %arg3[%c0_6, %c0_7, %c0_8] : memref<1x1x32xf32, #tpu.memory_space<vmem>>, vector<1x1x32xf32>
    %5 = vector.broadcast %4 : vector<1x1x32xf32> to vector<8x2x32xf32>
    %6 = arith.addf %3, %5 : vector<8x2x32xf32>
    %cst_9 = arith.constant 0.000000e+00 : f32
    %7 = vector.broadcast %cst_9 : f32 to vector<2x32xf32>
    %8 = vector.extract_strided_slice %6 {offsets = [0, 0, 0], sizes = [1, 2, 32], strides = [1, 1, 1]} : vector<8x2x32xf32> to vector<1x2x32xf32>
    %9 = vector.shape_cast %8 : vector<1x2x32xf32> to vector<2x32xf32>
    %cst_10 = arith.constant dense<0.000000e+00> : vector<2x32xf32>
    %10 = tpu.matmul %7, %2, %cst_10 {dimension_numbers = #tpu.dot_dimension_numbers<[1], [0], [0], [1], [0, 0, 1, 1], [], []>} : vector<2x32xf32>, vector<32x32xf32>, vector<2x32xf32> -> vector<2x32xf32>
    %11 = arith.addf %9, %10 : vector<2x32xf32>
    %12 = math.tanh %11 : vector<2x32xf32>
    %13 = vector.extract_strided_slice %6 {offsets = [1, 0, 0], sizes = [1, 2, 32], strides = [1, 1, 1]} : vector<8x2x32xf32> to vector<1x2x32xf32>
    %14 = vector.shape_cast %13 : vector<1x2x32xf32> to vector<2x32xf32>
    %cst_11 = arith.constant dense<0.000000e+00> : vector<2x32xf32>
    %15 = tpu.matmul %12, %2, %cst_11 {dimension_numbers = #tpu.dot_dimension_numbers<[1], [0], [0], [1], [0, 0, 1, 1], [], []>} : vector<2x32xf32>, vector<32x32xf32>, vector<2x32xf32> -> vector<2x32xf32>
    %16 = arith.addf %14, %15 : vector<2x32xf32>
    %17 = math.tanh %16 : vector<2x32xf32>
    %18 = vector.extract_strided_slice %6 {offsets = [2, 0, 0], sizes = [1, 2, 32], strides = [1, 1, 1]} : vector<8x2x32xf32> to vector<1x2x32xf32>
    %19 = vector.shape_cast %18 : vector<1x2x32xf32> to vector<2x32xf32>
    %cst_12 = arith.constant dense<0.000000e+00> : vector<2x32xf32>
    %20 = tpu.matmul %17, %2, %cst_12 {dimension_numbers = #tpu.dot_dimension_numbers<[1], [0], [0], [1], [0, 0, 1, 1], [], []>} : vector<2x32xf32>, vector<32x32xf32>, vector<2x32xf32> -> vector<2x32xf32>
    %21 = arith.addf %19, %20 : vector<2x32xf32>
    %22 = math.tanh %21 : vector<2x32xf32>
    %23 = vector.extract_strided_slice %6 {offsets = [3, 0, 0], sizes = [1, 2, 32], strides = [1, 1, 1]} : vector<8x2x32xf32> to vector<1x2x32xf32>
    %24 = vector.shape_cast %23 : vector<1x2x32xf32> to vector<2x32xf32>
    %cst_13 = arith.constant dense<0.000000e+00> : vector<2x32xf32>
    %25 = tpu.matmul %22, %2, %cst_13 {dimension_numbers = #tpu.dot_dimension_numbers<[1], [0], [0], [1], [0, 0, 1, 1], [], []>} : vector<2x32xf32>, vector<32x32xf32>, vector<2x32xf32> -> vector<2x32xf32>
    %26 = arith.addf %24, %25 : vector<2x32xf32>
    %27 = math.tanh %26 : vector<2x32xf32>
    %28 = vector.extract_strided_slice %6 {offsets = [4, 0, 0], sizes = [1, 2, 32], strides = [1, 1, 1]} : vector<8x2x32xf32> to vector<1x2x32xf32>
    %29 = vector.shape_cast %28 : vector<1x2x32xf32> to vector<2x32xf32>
    %cst_14 = arith.constant dense<0.000000e+00> : vector<2x32xf32>
    %30 = tpu.matmul %27, %2, %cst_14 {dimension_numbers = #tpu.dot_dimension_numbers<[1], [0], [0], [1], [0, 0, 1, 1], [], []>} : vector<2x32xf32>, vector<32x32xf32>, vector<2x32xf32> -> vector<2x32xf32>
    %31 = arith.addf %29, %30 : vector<2x32xf32>
    %32 = math.tanh %31 : vector<2x32xf32>
    %33 = vector.extract_strided_slice %6 {offsets = [5, 0, 0], sizes = [1, 2, 32], strides = [1, 1, 1]} : vector<8x2x32xf32> to vector<1x2x32xf32>
    %34 = vector.shape_cast %33 : vector<1x2x32xf32> to vector<2x32xf32>
    %cst_15 = arith.constant dense<0.000000e+00> : vector<2x32xf32>
    %35 = tpu.matmul %32, %2, %cst_15 {dimension_numbers = #tpu.dot_dimension_numbers<[1], [0], [0], [1], [0, 0, 1, 1], [], []>} : vector<2x32xf32>, vector<32x32xf32>, vector<2x32xf32> -> vector<2x32xf32>
    %36 = arith.addf %34, %35 : vector<2x32xf32>
    %37 = math.tanh %36 : vector<2x32xf32>
    %38 = vector.extract_strided_slice %6 {offsets = [6, 0, 0], sizes = [1, 2, 32], strides = [1, 1, 1]} : vector<8x2x32xf32> to vector<1x2x32xf32>
    %39 = vector.shape_cast %38 : vector<1x2x32xf32> to vector<2x32xf32>
    %cst_16 = arith.constant dense<0.000000e+00> : vector<2x32xf32>
    %40 = tpu.matmul %37, %2, %cst_16 {dimension_numbers = #tpu.dot_dimension_numbers<[1], [0], [0], [1], [0, 0, 1, 1], [], []>} : vector<2x32xf32>, vector<32x32xf32>, vector<2x32xf32> -> vector<2x32xf32>
    %41 = arith.addf %39, %40 : vector<2x32xf32>
    %42 = math.tanh %41 : vector<2x32xf32>
    %43 = vector.extract_strided_slice %6 {offsets = [7, 0, 0], sizes = [1, 2, 32], strides = [1, 1, 1]} : vector<8x2x32xf32> to vector<1x2x32xf32>
    %44 = vector.shape_cast %43 : vector<1x2x32xf32> to vector<2x32xf32>
    %cst_17 = arith.constant dense<0.000000e+00> : vector<2x32xf32>
    %45 = tpu.matmul %42, %2, %cst_17 {dimension_numbers = #tpu.dot_dimension_numbers<[1], [0], [0], [1], [0, 0, 1, 1], [], []>} : vector<2x32xf32>, vector<32x32xf32>, vector<2x32xf32> -> vector<2x32xf32>
    %46 = arith.addf %44, %45 : vector<2x32xf32>
    %47 = math.tanh %46 : vector<2x32xf32>
    %c0_18 = arith.constant 0 : index
    %c0_19 = arith.constant 0 : index
    %48 = vector.load %arg4[%c0_18, %c0_19] : memref<32x8xf32, #tpu.memory_space<vmem>>, vector<32x8xf32>
    %cst_20 = arith.constant dense<0.000000e+00> : vector<2x8xf32>
    %49 = tpu.matmul %47, %48, %cst_20 {dimension_numbers = #tpu.dot_dimension_numbers<[1], [0], [0], [1], [0, 0, 1, 1], [], []>} : vector<2x32xf32>, vector<32x8xf32>, vector<2x8xf32> -> vector<2x8xf32>
    %c0_21 = arith.constant 0 : index
    %c0_22 = arith.constant 0 : index
    %50 = vector.load %arg5[%c0_21, %c0_22] : memref<1x8xf32, #tpu.memory_space<vmem>>, vector<1x8xf32>
    %51 = vector.broadcast %50 : vector<1x8xf32> to vector<2x8xf32>
    %52 = arith.addf %49, %51 : vector<2x8xf32>
    %c0_23 = arith.constant 0 : index
    %c0_24 = arith.constant 0 : index
    %53 = vector.load %arg6[%c0_23, %c0_24] : memref<2x8xf32, #tpu.memory_space<vmem>>, vector<2x8xf32>
    tpu.vector_store %arg6[%c0_23, %c0_24], %52 {strides = array<i32>} : memref<2x8xf32, #tpu.memory_space<vmem>>, vector<2x8xf32>,
    return
  }
}

</mosaic_0001>

<llo_original>
// kernel: tpu_custom_call.1
$region0: #{tpu_custom_call.1}
  #allocation0 [shape = 'u32[]', space=smem, size = 0x4, offset = 0x4, fixed_abs, tag = 'smem constant byte address 0x4 - core index']
  #allocation1 [shape = 'u32[144,128]{1,0:T(1,128)}', space=vmem, size = 0x12000, scoped, tag = 'internal scratch']
  %s0 = inlined_call_operand.hbm [shape: f32[8,2,16], index: 0, kind: input, shape index: {}]
  %s1 = inlined_call_operand.hbm [shape: f32[16,32], index: 1, kind: input, shape index: {}]
  %s2 = inlined_call_operand.vmem [shape: f32[32,32], index: 2, kind: input, shape index: {}]
  %s3 = inlined_call_operand.vmem [shape: f32[1,1,32], index: 3, kind: input, shape index: {}]
  %s4 = inlined_call_operand.vmem [shape: f32[32,8], index: 4, kind: input, shape index: {}]
  %s5 = inlined_call_operand.vmem [shape: f32[1,8], index: 5, kind: input, shape index: {}]
  %s6 = inlined_call_operand.hbm [shape: f32[2,8], index: 6, kind: output, shape index: {}]
  %s7 = sld [smem:[#allocation0]]
  $region42: #{tpu_custom_call.1} parent=0
    _
  %s9 = ssub.s32 1, %s7
  %s10 = scalar_select 0, %s9, %s7
  $region1: #{tpu_custom_call.1} parent=0
    #allocation2 [shape = 'u8[8192]{0}', space=vmem, size = 0x2000, scoped, tag = 'input window, operand 0, single buffered']
    #allocation3 [shape = 's32[1]{0}', space=sflag, size = 0x4, scoped, tag = 'scoped memory for tpu_custom_call.1']
    #allocation4 [shape = 's32[1]{0}', space=sflag, size = 0x4, scoped, tag = 'scoped memory for tpu_custom_call.1']
    #allocation5 [shape = 'u8[8192]{0}', space=vmem, size = 0x2000, scoped, tag = 'input window, operand 1, single buffered']
    #allocation6 [shape = 's32[1]{0}', space=sflag, size = 0x4, scoped, tag = 'scoped memory for tpu_custom_call.1']
    #allocation7 [shape = 'u8[1024]{0}', space=vmem, size = 0x400, scoped, tag = 'output window, operand 0, single buffered']
    %11 = vsyncpa [#allocation3], 0
    %12 = vsyncpa [#allocation6], 0
    %13 = vsyncpa [#allocation4], 0
    // Predicated region
    $region2: #{tpu_custom_call.1} parent=1 // pred_check
      _
    $region3: #{tpu_custom_call.1} parent=1 // pred_check_branch
      %15 = sbr.rel (0) target = $region5
    $region4: #{tpu_custom_call.1} parent=1 // pred_region
      %s17 = ssub.s32 256, 256
      %18 = vsyncadd [#allocation3], %s17
      %s19 = sshll.u32 [#allocation2], 4
      %s20 = int_to_ptr.vmem [resolvable:$true] %s19
      %25 = dma.hbm_to_vmem [thread:$0]  %s0, 256, %s20, [#allocation3], 32, 32, 2
    $region5: #{tpu_custom_call.1} parent=1 // pred_fallthru
      _
    // Predicated region
    $region6: #{tpu_custom_call.1} parent=1 // pred_check
      _
    $region7: #{tpu_custom_call.1} parent=1 // pred_check_branch
      %27 = sbr.rel (0) target = $region9
    $region8: #{tpu_custom_call.1} parent=1 // pred_region
      %s29 = ssub.s32 256, 256
      %30 = vsyncadd [#allocation6], %s29
      %s31 = sshll.u32 [#allocation5], 4
      %s32 = int_to_ptr.vmem [resolvable:$true] %s31
      %37 = dma.hbm_to_vmem [thread:$0]  %s1, 256, %s32, [#allocation6], 128, 128, 8
    $region9: #{tpu_custom_call.1} parent=1 // pred_fallthru
      _
    // Predicated region
    $region10: #{tpu_custom_call.1} parent=1 // pred_check
      _
    $region11: #{tpu_custom_call.1} parent=1 // pred_check_branch
      %39 = sbr.rel (0) target = $region13
    $region12: #{tpu_custom_call.1} parent=1 // pred_region
      _
    $region13: #{tpu_custom_call.1} parent=1 // pred_fallthru
      _
    // Predicated region
    $region14: #{tpu_custom_call.1} parent=1 // pred_check
      _
    $region15: #{tpu_custom_call.1} parent=1 // pred_check_branch
      %41 = sbr.rel (0) target = $region17
    $region16: #{tpu_custom_call.1} parent=1 // pred_region
      _
    $region17: #{tpu_custom_call.1} parent=1 // pred_fallthru
      _
    // Predicated region
    $region18: #{tpu_custom_call.1} parent=1 // pred_check
      _
    $region19: #{tpu_custom_call.1} parent=1 // pred_check_branch
      %43 = sbr.rel (0) target = $region21
    $region20: #{tpu_custom_call.1} parent=1 // pred_region
      _
    $region21: #{tpu_custom_call.1} parent=1 // pred_fallthru
      _
    // Predicated region
    $region22: #{tpu_custom_call.1} parent=1 // pred_check
      _
    $region23: #{tpu_custom_call.1} parent=1 // pred_check_branch
      %45 = sbr.rel (0) target = $region25
    $region24: #{tpu_custom_call.1} parent=1 // pred_region
      _
    $region25: #{tpu_custom_call.1} parent=1 // pred_fallthru
      _
    // Predicated region
    $region26: #{tpu_custom_call.1} parent=1 // pred_check
      _
    $region27: #{tpu_custom_call.1} parent=1 // pred_check_branch
      %47 = sbr.rel (0) target = $region29
    $region28: #{tpu_custom_call.1} parent=1 // pred_region
      %48 = dma.done [#allocation3], 256
    $region29: #{tpu_custom_call.1} parent=1 // pred_fallthru
      _
    // Predicated region
    $region30: #{tpu_custom_call.1} parent=1 // pred_check
      _
    $region31: #{tpu_custom_call.1} parent=1 // pred_check_branch
      %50 = sbr.rel (0) target = $region33
    $region32: #{tpu_custom_call.1} parent=1 // pred_region
      %51 = dma.done [#allocation6], 256
    $region33: #{tpu_custom_call.1} parent=1 // pred_fallthru
      _
    %v52 = vld [vmem:[#allocation2] sm:$0x3]
    %v53 = vld [vmem:[#allocation2 + $0x2] sm:$0x3]
    %v54 = vld [vmem:[#allocation2 + $0x4] sm:$0x3]
    %v55 = vld [vmem:[#allocation2 + $0x6] sm:$0x3]
    %v56 = vld [vmem:[#allocation2 + $0x8] sm:$0x3]
    %v57 = vld [vmem:[#allocation2 + $0xa] sm:$0x3]
    %v58 = vld [vmem:[#allocation2 + $0xc] sm:$0x3]
    %v59 = vld [vmem:[#allocation2 + $0xe] sm:$0x3]
    %v60 = vld [vmem:[#allocation5] sm:$0xff]
    %v61 = vld [vmem:[#allocation5 + $0x8] sm:$0xff]
    %v62 = vld [vmem:[%s2] sm:$0xff]
    %v63 = vld [vmem:[%s2 + $0x8] sm:$0xff]
    %v64 = vld [vmem:[%s2 + $0x10] sm:$0xff]
    %v65 = vld [vmem:[%s2 + $0x18] sm:$0xff]
    %v66 = vld [vmem:[%s3] sm:$0x1]
    %v68 = vlaneseq
    %v69 = vshrl.u32 %v68, 7
    %v70 = vsub.s32 0, %v69
    %v71 = vrot.slane %v66, %v70
    %v80 = vcombine.low %v52, %v53
    %v81 = vcombine.low %v54, %v55
    %v83 = vunpack.c.l.s4 1983009808
    %v84 = vunpack.c.0.s8 %v83
    %v85 = vlaneseq
    %v86 = vshrl.u32 %v85, 7
    %v87 = vsub.s32 %v84, %v86
    %v88 = vrot.slane %v80, %v87
    %v90 = vunpack.c.l.s4 1983009808
    %v91 = vunpack.c.0.s8 %v90
    %v92 = vlaneseq
    %v93 = vshrl.u32 %v92, 7
    %v94 = vsub.s32 %v91, %v93
    %v95 = vrot.slane %v81, %v94
    %v96 = vcombine.low %v88, %v95
    %v97 = vcombine.low %v56, %v57
    %v98 = vcombine.low %v58, %v59
    %v100 = vunpack.c.l.s4 1983009808
    %v101 = vunpack.c.0.s8 %v100
    %v102 = vlaneseq
    %v103 = vshrl.u32 %v102, 7
    %v104 = vsub.s32 %v101, %v103
    %v105 = vrot.slane %v97, %v104
    %v107 = vunpack.c.l.s4 1983009808
    %v108 = vunpack.c.0.s8 %v107
    %v109 = vlaneseq
    %v110 = vshrl.u32 %v109, 7
    %v111 = vsub.s32 %v108, %v110
    %v112 = vrot.slane %v98, %v111
    %v113 = vcombine.low %v105, %v112
    %v114 = vcombine.low %v71, %v71
    %v116 = vunpack.c.l.s4 1983009808
    %v117 = vunpack.c.0.s8 %v116
    %v118 = vlaneseq
    %v119 = vshrl.u32 %v118, 7
    %v120 = vsub.s32 %v117, %v119
    %v121 = vrot.slane %v114, %v120
    %v122 = vcombine.low %v121, %v121
    %vm124 = vcmask 130048
    %v125 = vsel %vm124, %v96, 0
    %v127 = vsel %vm124, %v113, 0
    %129 = vmatprep.subr.mxu0 0.0
    %130 = vmatpush1.msra.mxu0 %v60
    %131 = vmatprep.subr.mxu0 0.0
    %132 = vmatpush1.msra.mxu0 %v61
    %133 = vmatprep.subr.mxu0 0.0
    %134 = vmatpush1.msra.mxu0 0.0
    %135 = vmatprep.subr.mxu0 0.0
    %136 = vmatpush1.msra.mxu0 0.0
    %137 = vmatprep.subr.mxu0 0.0
    %138 = vmatpush1.msra.mxu0 0.0
    %139 = vmatprep.subr.mxu0 0.0
    %140 = vmatpush1.msra.mxu0 0.0
    %141 = vmatprep.subr.mxu0 0.0
    %142 = vmatpush1.msra.mxu0 0.0
    %143 = vmatprep.subr.mxu0 0.0
    %144 = vmatpush1.msra.mxu0 0.0
    %145 = vmatprep.subr.mxu0 0.0
    %146 = vmatpush1.msra.mxu0 0.0
    %147 = vmatprep.subr.mxu0 0.0
    %148 = vmatpush1.msra.mxu0 0.0
    %149 = vmatprep.subr.mxu0 0.0
    %150 = vmatpush1.msra.mxu0 0.0
    %151 = vmatprep.subr.mxu0 0.0
    %152 = vmatpush1.msra.mxu0 0.0
    %153 = vmatprep.subr.mxu0 0.0
    %154 = vmatpush1.msra.mxu0 0.0
    %155 = vmatprep.subr.mxu0 0.0
    %156 = vmatpush1.msra.mxu0 0.0
    %157 = vmatprep.subr.mxu0 0.0
    %158 = vmatpush1.msra.mxu0 0.0
    %159 = vmatprep.subr.mxu0 0.0
    %160 = vmatpush1.msra.mxu0 0.0
    %161 = vmatprep.subr.mxu0 0.0
    %162 = vmatpush1.msra.mxu0 0.0
    %163 = vmatprep.subr.mxu0 0.0
    %164 = vmatpush1.msra.mxu0 0.0
    %165 = vmatprep.subr.mxu0 0.0
    %166 = vmatpush1.msra.mxu0 0.0
    %167 = vmatprep.subr.mxu0 0.0
    %168 = vmatpush1.msra.mxu0 0.0
    %169 = vmatprep.subr.mxu0 0.0
    %170 = vmatpush1.msra.mxu0 0.0
    %171 = vmatprep.subr.mxu0 0.0
    %172 = vmatpush1.msra.mxu0 0.0
    %173 = vmatprep.subr.mxu0 0.0
    %174 = vmatpush1.msra.mxu0 0.0
    %175 = vmatprep.subr.mxu0 0.0
    %176 = vmatpush1.msra.mxu0 0.0
    %177 = vmatprep.subr.mxu0 0.0
    %178 = vmatpush1.msra.mxu0 0.0
    %179 = vmatprep.subr.mxu0 0.0
    %180 = vmatpush1.msra.mxu0 0.0
    %181 = vmatprep.subr.mxu0 0.0
    %182 = vmatpush1.msra.mxu0 0.0
    %183 = vmatprep.subr.mxu0 0.0
    %184 = vmatpush1.msra.mxu0 0.0
    %185 = vmatprep.subr.mxu0 0.0
    %186 = vmatpush1.msra.mxu0 0.0
    %187 = vmatprep.subr.mxu0 0.0
    %188 = vmatpush1.msra.mxu0 0.0
    %189 = vmatprep.subr.mxu0 0.0
    %190 = vmatpush1.msra.mxu0 0.0
    %191 = vmatprep.subr.mxu0 0.0
    %192 = vmatpush1.msra.mxu0 0.0
    %193 = vmatprep.mubr.f32.mxu0 0.0
    %194 = vmatmul.mubr.f32.gmra.mrb[0].mxu0 %v125
    %v195 = vpop.f32.mrb[0].mxu0
    %v196 = vadd.f32 %v122, %v195
    %v197 = vpop.f32.mrb[0].mxu0
    %198 = vmatprep.mubr.f32.mxu0 0.0
    %199 = vmatmul.mubr.f32.gmra.mrb[0].mxu0 %v127
    %v200 = vpop.f32.mrb[0].mxu0
    %v201 = vadd.f32 %v122, %v200
    %v202 = vpop.f32.mrb[0].mxu0
    %203 = vdwg.mxu0
    %v206 = vcombine.high %v196, %v196
    %v208 = vunpack.c.l.s4 1983009808
    %v209 = vunpack.c.0.s8 %v208
    %v210 = vlaneseq
    %v211 = vshrl.u32 %v210, 7
    %v212 = vsub.s32 %v209, %v211
    %v213 = vrot.slane %v196, %v212
    %v215 = vunpack.c.l.s4 1983009808
    %v216 = vunpack.c.0.s8 %v215
    %v217 = vlaneseq
    %v218 = vshrl.u32 %v217, 7
    %v219 = vsub.s32 %v216, %v218
    %v220 = vrot.slane %v206, %v219
    %v221 = vcombine.high %v213, %v213
    %v222 = vcombine.high %v220, %v220
    %v223 = vcombine.high %v201, %v201
    %v225 = vunpack.c.l.s4 1983009808
    %v226 = vunpack.c.0.s8 %v225
    %v227 = vlaneseq
    %v228 = vshrl.u32 %v227, 7
    %v229 = vsub.s32 %v226, %v228
    %v230 = vrot.slane %v201, %v229
    %v232 = vunpack.c.l.s4 1983009808
    %v233 = vunpack.c.0.s8 %v232
    %v234 = vlaneseq
    %v235 = vshrl.u32 %v234, 7
    %v236 = vsub.s32 %v233, %v235
    %v237 = vrot.slane %v223, %v236
    %v238 = vcombine.high %v230, %v230
    %v239 = vcombine.high %v237, %v237
    %vm248 = vcmask 261120
    %v250 = vsel %vm248, 0.0, 0
    %252 = vmatprep.subr.mxu0 0.0
    %253 = vmatpush1.msra.mxu0 %v62
    %254 = vmatprep.subr.mxu0 0.0
    %255 = vmatpush1.msra.mxu0 %v63
    %256 = vmatprep.subr.mxu0 0.0
    %257 = vmatpush1.msra.mxu0 %v64
    %258 = vmatprep.subr.mxu0 0.0
    %259 = vmatpush1.msra.mxu0 %v65
    %260 = vmatprep.subr.mxu0 0.0
    %261 = vmatpush1.msra.mxu0 0.0
    %262 = vmatprep.subr.mxu0 0.0
    %263 = vmatpush1.msra.mxu0 0.0
    %264 = vmatprep.subr.mxu0 0.0
    %265 = vmatpush1.msra.mxu0 0.0
    %266 = vmatprep.subr.mxu0 0.0
    %267 = vmatpush1.msra.mxu0 0.0
    %268 = vmatprep.subr.mxu0 0.0
    %269 = vmatpush1.msra.mxu0 0.0
    %270 = vmatprep.subr.mxu0 0.0
    %271 = vmatpush1.msra.mxu0 0.0
    %272 = vmatprep.subr.mxu0 0.0
    %273 = vmatpush1.msra.mxu0 0.0
    %274 = vmatprep.subr.mxu0 0.0
    %275 = vmatpush1.msra.mxu0 0.0
    %276 = vmatprep.subr.mxu0 0.0
    %277 = vmatpush1.msra.mxu0 0.0
    %278 = vmatprep.subr.mxu0 0.0
    %279 = vmatpush1.msra.mxu0 0.0
    %280 = vmatprep.subr.mxu0 0.0
    %281 = vmatpush1.msra.mxu0 0.0
    %282 = vmatprep.subr.mxu0 0.0
    %283 = vmatpush1.msra.mxu0 0.0
    %284 = vmatprep.subr.mxu0 0.0
    %285 = vmatpush1.msra.mxu0 0.0
    %286 = vmatprep.subr.mxu0 0.0
    %287 = vmatpush1.msra.mxu0 0.0
    %288 = vmatprep.subr.mxu0 0.0
    %289 = vmatpush1.msra.mxu0 0.0
    %290 = vmatprep.subr.mxu0 0.0
    %291 = vmatpush1.msra.mxu0 0.0
    %292 = vmatprep.subr.mxu0 0.0
    %293 = vmatpush1.msra.mxu0 0.0
    %294 = vmatprep.subr.mxu0 0.0
    %295 = vmatpush1.msra.mxu0 0.0
    %296 = vmatprep.subr.mxu0 0.0
    %297 = vmatpush1.msra.mxu0 0.0
    %298 = vmatprep.subr.mxu0 0.0
    %299 = vmatpush1.msra.mxu0 0.0
    %300 = vmatprep.subr.mxu0 0.0
    %301 = vmatpush1.msra.mxu0 0.0
    %302 = vmatprep.subr.mxu0 0.0
    %303 = vmatpush1.msra.mxu0 0.0
    %304 = vmatprep.subr.mxu0 0.0
    %305 = vmatpush1.msra.mxu0 0.0
    %306 = vmatprep.subr.mxu0 0.0
    %307 = vmatpush1.msra.mxu0 0.0
    %308 = vmatprep.subr.mxu0 0.0
    %309 = vmatpush1.msra.mxu0 0.0
    %310 = vmatprep.subr.mxu0 0.0
    %311 = vmatpush1.msra.mxu0 0.0
    %312 = vmatprep.subr.mxu0 0.0
    %313 = vmatpush1.msra.mxu0 0.0
    %314 = vmatprep.subr.mxu0 0.0
    %315 = vmatpush1.msra.mxu0 0.0
    %316 = vmatprep.mubr.f32.mxu0 0.0
    %317 = vmatmul.mubr.f32.gmra.mrb[0].mxu0 %v250
    %v318 = vpop.f32.mrb[0].mxu0
    %v319 = vadd.f32 0.0, %v318
    %v320 = vpop.f32.mrb[0].mxu0
    %321 = vdwg.mxu0
    %v322 = vadd.f32 %v213, %v319
    %v323 = vtanh.pop %v322
    %v325 = vsel %vm248, %v323, 0
    %327 = vmatprep.subr.mxu0 0.0
    %328 = vmatpush1.msra.mxu0 %v62
    %329 = vmatprep.subr.mxu0 0.0
    %330 = vmatpush1.msra.mxu0 %v63
    %331 = vmatprep.subr.mxu0 0.0
    %332 = vmatpush1.msra.mxu0 %v64
    %333 = vmatprep.subr.mxu0 0.0
    %334 = vmatpush1.msra.mxu0 %v65
    %335 = vmatprep.subr.mxu0 0.0
    %336 = vmatpush1.msra.mxu0 0.0
    %337 = vmatprep.subr.mxu0 0.0
    %338 = vmatpush1.msra.mxu0 0.0
    %339 = vmatprep.subr.mxu0 0.0
    %340 = vmatpush1.msra.mxu0 0.0
    %341 = vmatprep.subr.mxu0 0.0
    %342 = vmatpush1.msra.mxu0 0.0
    %343 = vmatprep.subr.mxu0 0.0
    %344 = vmatpush1.msra.mxu0 0.0
    %345 = vmatprep.subr.mxu0 0.0
    %346 = vmatpush1.msra.mxu0 0.0
    %347 = vmatprep.subr.mxu0 0.0
    %348 = vmatpush1.msra.mxu0 0.0
    %349 = vmatprep.subr.mxu0 0.0
    %350 = vmatpush1.msra.mxu0 0.0
    %351 = vmatprep.subr.mxu0 0.0
    %352 = vmatpush1.msra.mxu0 0.0
    %353 = vmatprep.subr.mxu0 0.0
    %354 = vmatpush1.msra.mxu0 0.0
    %355 = vmatprep.subr.mxu0 0.0
    %356 = vmatpush1.msra.mxu0 0.0
    %357 = vmatprep.subr.mxu0 0.0
    %358 = vmatpush1.msra.mxu0 0.0
    %359 = vmatprep.subr.mxu0 0.0
    %360 = vmatpush1.msra.mxu0 0.0
    %361 = vmatprep.subr.mxu0 0.0
    %362 = vmatpush1.msra.mxu0 0.0
    %363 = vmatprep.subr.mxu0 0.0
    %364 = vmatpush1.msra.mxu0 0.0
    %365 = vmatprep.subr.mxu0 0.0
    %366 = vmatpush1.msra.mxu0 0.0
    %367 = vmatprep.subr.mxu0 0.0
    %368 = vmatpush1.msra.mxu0 0.0
    %369 = vmatprep.subr.mxu0 0.0
    %370 = vmatpush1.msra.mxu0 0.0
    %371 = vmatprep.subr.mxu0 0.0
    %372 = vmatpush1.msra.mxu0 0.0
    %373 = vmatprep.subr.mxu0 0.0
    %374 = vmatpush1.msra.mxu0 0.0
    %375 = vmatprep.subr.mxu0 0.0
    %376 = vmatpush1.msra.mxu0 0.0
    %377 = vmatprep.subr.mxu0 0.0
    %378 = vmatpush1.msra.mxu0 0.0
    %379 = vmatprep.subr.mxu0 0.0
    %380 = vmatpush1.msra.mxu0 0.0
    %381 = vmatprep.subr.mxu0 0.0
    %382 = vmatpush1.msra.mxu0 0.0
    %383 = vmatprep.subr.mxu0 0.0
    %384 = vmatpush1.msra.mxu0 0.0
    %385 = vmatprep.subr.mxu0 0.0
    %386 = vmatpush1.msra.mxu0 0.0
    %387 = vmatprep.subr.mxu0 0.0
    %388 = vmatpush1.msra.mxu0 0.0
    %389 = vmatprep.subr.mxu0 0.0
    %390 = vmatpush1.msra.mxu0 0.0
    %391 = vmatprep.mubr.f32.mxu0 0.0
    %392 = vmatmul.mubr.f32.gmra.mrb[0].mxu0 %v325
    %v393 = vpop.f32.mrb[0].mxu0
    %v394 = vadd.f32 0.0, %v393
    %v395 = vpop.f32.mrb[0].mxu0
    %396 = vdwg.mxu0
    %v397 = vadd.f32 %v221, %v394
    %v398 = vtanh.pop %v397
    %v400 = vsel %vm248, %v398, 0
    %402 = vmatprep.subr.mxu0 0.0
    %403 = vmatpush1.msra.mxu0 %v62
    %404 = vmatprep.subr.mxu0 0.0
    %405 = vmatpush1.msra.mxu0 %v63
    %406 = vmatprep.subr.mxu0 0.0
    %407 = vmatpush1.msra.mxu0 %v64
    %408 = vmatprep.subr.mxu0 0.0
    %409 = vmatpush1.msra.mxu0 %v65
    %410 = vmatprep.subr.mxu0 0.0
    %411 = vmatpush1.msra.mxu0 0.0
    %412 = vmatprep.subr.mxu0 0.0
    %413 = vmatpush1.msra.mxu0 0.0
    %414 = vmatprep.subr.mxu0 0.0
    %415 = vmatpush1.msra.mxu0 0.0
    %416 = vmatprep.subr.mxu0 0.0
    %417 = vmatpush1.msra.mxu0 0.0
    %418 = vmatprep.subr.mxu0 0.0
    %419 = vmatpush1.msra.mxu0 0.0
    %420 = vmatprep.subr.mxu0 0.0
    %421 = vmatpush1.msra.mxu0 0.0
    %422 = vmatprep.subr.mxu0 0.0
    %423 = vmatpush1.msra.mxu0 0.0
    %424 = vmatprep.subr.mxu0 0.0
    %425 = vmatpush1.msra.mxu0 0.0
    %426 = vmatprep.subr.mxu0 0.0
    %427 = vmatpush1.msra.mxu0 0.0
    %428 = vmatprep.subr.mxu0 0.0
    %429 = vmatpush1.msra.mxu0 0.0
    %430 = vmatprep.subr.mxu0 0.0
    %431 = vmatpush1.msra.mxu0 0.0
    %432 = vmatprep.subr.mxu0 0.0
    %433 = vmatpush1.msra.mxu0 0.0
    %434 = vmatprep.subr.mxu0 0.0
    %435 = vmatpush1.msra.mxu0 0.0
    %436 = vmatprep.subr.mxu0 0.0
    %437 = vmatpush1.msra.mxu0 0.0
    %438 = vmatprep.subr.mxu0 0.0
    %439 = vmatpush1.msra.mxu0 0.0
    %440 = vmatprep.subr.mxu0 0.0
    %441 = vmatpush1.msra.mxu0 0.0
    %442 = vmatprep.subr.mxu0 0.0
    %443 = vmatpush1.msra.mxu0 0.0
    %444 = vmatprep.subr.mxu0 0.0
    %445 = vmatpush1.msra.mxu0 0.0
    %446 = vmatprep.subr.mxu0 0.0
    %447 = vmatpush1.msra.mxu0 0.0
    %448 = vmatprep.subr.mxu0 0.0
    %449 = vmatpush1.msra.mxu0 0.0
    %450 = vmatprep.subr.mxu0 0.0
    %451 = vmatpush1.msra.mxu0 0.0
    %452 = vmatprep.subr.mxu0 0.0
    %453 = vmatpush1.msra.mxu0 0.0
    %454 = vmatprep.subr.mxu0 0.0
    %455 = vmatpush1.msra.mxu0 0.0
    %456 = vmatprep.subr.mxu0 0.0
    %457 = vmatpush1.msra.mxu0 0.0
    %458 = vmatprep.subr.mxu0 0.0
    %459 = vmatpush1.msra.mxu0 0.0
    %460 = vmatprep.subr.mxu0 0.0
    %461 = vmatpush1.msra.mxu0 0.0
    %462 = vmatprep.subr.mxu0 0.0
    %463 = vmatpush1.msra.mxu0 0.0
    %464 = vmatprep.subr.mxu0 0.0
    %465 = vmatpush1.msra.mxu0 0.0
    %466 = vmatprep.mubr.f32.mxu0 0.0
    %467 = vmatmul.mubr.f32.gmra.mrb[0].mxu0 %v400
    %v468 = vpop.f32.mrb[0].mxu0
    %v469 = vadd.f32 0.0, %v468
    %v470 = vpop.f32.mrb[0].mxu0
    %471 = vdwg.mxu0
    %v472 = vadd.f32 %v220, %v469
    %v473 = vtanh.pop %v472
    %v475 = vsel %vm248, %v473, 0
    %477 = vmatprep.subr.mxu0 0.0
    %478 = vmatpush1.msra.mxu0 %v62
    %479 = vmatprep.subr.mxu0 0.0
    %480 = vmatpush1.msra.mxu0 %v63
    %481 = vmatprep.subr.mxu0 0.0
    %482 = vmatpush1.msra.mxu0 %v64
    %483 = vmatprep.subr.mxu0 0.0
    %484 = vmatpush1.msra.mxu0 %v65
    %485 = vmatprep.subr.mxu0 0.0
    %486 = vmatpush1.msra.mxu0 0.0
    %487 = vmatprep.subr.mxu0 0.0
    %488 = vmatpush1.msra.mxu0 0.0
    %489 = vmatprep.subr.mxu0 0.0
    %490 = vmatpush1.msra.mxu0 0.0
    %491 = vmatprep.subr.mxu0 0.0
    %492 = vmatpush1.msra.mxu0 0.0
    %493 = vmatprep.subr.mxu0 0.0
    %494 = vmatpush1.msra.mxu0 0.0
    %495 = vmatprep.subr.mxu0 0.0
    %496 = vmatpush1.msra.mxu0 0.0
    %497 = vmatprep.subr.mxu0 0.0
    %498 = vmatpush1.msra.mxu0 0.0
    %499 = vmatprep.subr.mxu0 0.0
    %500 = vmatpush1.msra.mxu0 0.0
    %501 = vmatprep.subr.mxu0 0.0
    %502 = vmatpush1.msra.mxu0 0.0
    %503 = vmatprep.subr.mxu0 0.0
    %504 = vmatpush1.msra.mxu0 0.0
    %505 = vmatprep.subr.mxu0 0.0
    %506 = vmatpush1.msra.mxu0 0.0
    %507 = vmatprep.subr.mxu0 0.0
    %508 = vmatpush1.msra.mxu0 0.0
    %509 = vmatprep.subr.mxu0 0.0
    %510 = vmatpush1.msra.mxu0 0.0
    %511 = vmatprep.subr.mxu0 0.0
    %512 = vmatpush1.msra.mxu0 0.0
    %513 = vmatprep.subr.mxu0 0.0
    %514 = vmatpush1.msra.mxu0 0.0
    %515 = vmatprep.subr.mxu0 0.0
    %516 = vmatpush1.msra.mxu0 0.0
    %517 = vmatprep.subr.mxu0 0.0
    %518 = vmatpush1.msra.mxu0 0.0
    %519 = vmatprep.subr.mxu0 0.0
    %520 = vmatpush1.msra.mxu0 0.0
    %521 = vmatprep.subr.mxu0 0.0
    %522 = vmatpush1.msra.mxu0 0.0
    %523 = vmatprep.subr.mxu0 0.0
    %524 = vmatpush1.msra.mxu0 0.0
    %525 = vmatprep.subr.mxu0 0.0
    %526 = vmatpush1.msra.mxu0 0.0
    %527 = vmatprep.subr.mxu0 0.0
    %528 = vmatpush1.msra.mxu0 0.0
    %529 = vmatprep.subr.mxu0 0.0
    %530 = vmatpush1.msra.mxu0 0.0
    %531 = vmatprep.subr.mxu0 0.0
    %532 = vmatpush1.msra.mxu0 0.0
    %533 = vmatprep.subr.mxu0 0.0
    %534 = vmatpush1.msra.mxu0 0.0
    %535 = vmatprep.subr.mxu0 0.0
    %536 = vmatpush1.msra.mxu0 0.0
    %537 = vmatprep.subr.mxu0 0.0
    %538 = vmatpush1.msra.mxu0 0.0
    %539 = vmatprep.subr.mxu0 0.0
    %540 = vmatpush1.msra.mxu0 0.0
    %541 = vmatprep.mubr.f32.mxu0 0.0
    %542 = vmatmul.mubr.f32.gmra.mrb[0].mxu0 %v475
    %v543 = vpop.f32.mrb[0].mxu0
    %v544 = vadd.f32 0.0, %v543
    %v545 = vpop.f32.mrb[0].mxu0
    %546 = vdwg.mxu0
    %v547 = vadd.f32 %v222, %v544
    %v548 = vtanh.pop %v547
    %v550 = vsel %vm248, %v548, 0
    %552 = vmatprep.subr.mxu0 0.0
    %553 = vmatpush1.msra.mxu0 %v62
    %554 = vmatprep.subr.mxu0 0.0
    %555 = vmatpush1.msra.mxu0 %v63
    %556 = vmatprep.subr.mxu0 0.0
    %557 = vmatpush1.msra.mxu0 %v64
    %558 = vmatprep.subr.mxu0 0.0
    %559 = vmatpush1.msra.mxu0 %v65
    %560 = vmatprep.subr.mxu0 0.0
    %561 = vmatpush1.msra.mxu0 0.0
    %562 = vmatprep.subr.mxu0 0.0
    %563 = vmatpush1.msra.mxu0 0.0
    %564 = vmatprep.subr.mxu0 0.0
    %565 = vmatpush1.msra.mxu0 0.0
    %566 = vmatprep.subr.mxu0 0.0
    %567 = vmatpush1.msra.mxu0 0.0
    %568 = vmatprep.subr.mxu0 0.0
    %569 = vmatpush1.msra.mxu0 0.0
    %570 = vmatprep.subr.mxu0 0.0
    %571 = vmatpush1.msra.mxu0 0.0
    %572 = vmatprep.subr.mxu0 0.0
    %573 = vmatpush1.msra.mxu0 0.0
    %574 = vmatprep.subr.mxu0 0.0
    %575 = vmatpush1.msra.mxu0 0.0
    %576 = vmatprep.subr.mxu0 0.0
    %577 = vmatpush1.msra.mxu0 0.0
    %578 = vmatprep.subr.mxu0 0.0
    %579 = vmatpush1.msra.mxu0 0.0
    %580 = vmatprep.subr.mxu0 0.0
    %581 = vmatpush1.msra.mxu0 0.0
    %582 = vmatprep.subr.mxu0 0.0
    %583 = vmatpush1.msra.mxu0 0.0
    %584 = vmatprep.subr.mxu0 0.0
    %585 = vmatpush1.msra.mxu0 0.0
    %586 = vmatprep.subr.mxu0 0.0
    %587 = vmatpush1.msra.mxu0 0.0
    %588 = vmatprep.subr.mxu0 0.0
    %589 = vmatpush1.msra.mxu0 0.0
    %590 = vmatprep.subr.mxu0 0.0
    %591 = vmatpush1.msra.mxu0 0.0
    %592 = vmatprep.subr.mxu0 0.0
    %593 = vmatpush1.msra.mxu0 0.0
    %594 = vmatprep.subr.mxu0 0.0
    %595 = vmatpush1.msra.mxu0 0.0
    %596 = vmatprep.subr.mxu0 0.0
    %597 = vmatpush1.msra.mxu0 0.0
    %598 = vmatprep.subr.mxu0 0.0
    %599 = vmatpush1.msra.mxu0 0.0
    %600 = vmatprep.subr.mxu0 0.0
    %601 = vmatpush1.msra.mxu0 0.0
    %602 = vmatprep.subr.mxu0 0.0
    %603 = vmatpush1.msra.mxu0 0.0
    %604 = vmatprep.subr.mxu0 0.0
    %605 = vmatpush1.msra.mxu0 0.0
    %606 = vmatprep.subr.mxu0 0.0
    %607 = vmatpush1.msra.mxu0 0.0
    %608 = vmatprep.subr.mxu0 0.0
    %609 = vmatpush1.msra.mxu0 0.0
    %610 = vmatprep.subr.mxu0 0.0
    %611 = vmatpush1.msra.mxu0 0.0
    %612 = vmatprep.subr.mxu0 0.0
    %613 = vmatpush1.msra.mxu0 0.0
    %614 = vmatprep.subr.mxu0 0.0
    %615 = vmatpush1.msra.mxu0 0.0
    %616 = vmatprep.mubr.f32.mxu0 0.0
    %617 = vmatmul.mubr.f32.gmra.mrb[0].mxu0 %v550
    %v618 = vpop.f32.mrb[0].mxu0
    %v619 = vadd.f32 0.0, %v618
    %v620 = vpop.f32.mrb[0].mxu0
    %621 = vdwg.mxu0
    %v622 = vadd.f32 %v230, %v619
    %v623 = vtanh.pop %v622
    %v625 = vsel %vm248, %v623, 0
    %627 = vmatprep.subr.mxu0 0.0
    %628 = vmatpush1.msra.mxu0 %v62
    %629 = vmatprep.subr.mxu0 0.0
    %630 = vmatpush1.msra.mxu0 %v63
    %631 = vmatprep.subr.mxu0 0.0
    %632 = vmatpush1.msra.mxu0 %v64
    %633 = vmatprep.subr.mxu0 0.0
    %634 = vmatpush1.msra.mxu0 %v65
    %635 = vmatprep.subr.mxu0 0.0
    %636 = vmatpush1.msra.mxu0 0.0
    %637 = vmatprep.subr.mxu0 0.0
    %638 = vmatpush1.msra.mxu0 0.0
    %639 = vmatprep.subr.mxu0 0.0
    %640 = vmatpush1.msra.mxu0 0.0
    %641 = vmatprep.subr.mxu0 0.0
    %642 = vmatpush1.msra.mxu0 0.0
    %643 = vmatprep.subr.mxu0 0.0
    %644 = vmatpush1.msra.mxu0 0.0
    %645 = vmatprep.subr.mxu0 0.0
    %646 = vmatpush1.msra.mxu0 0.0
    %647 = vmatprep.subr.mxu0 0.0
    %648 = vmatpush1.msra.mxu0 0.0
    %649 = vmatprep.subr.mxu0 0.0
    %650 = vmatpush1.msra.mxu0 0.0
    %651 = vmatprep.subr.mxu0 0.0
    %652 = vmatpush1.msra.mxu0 0.0
    %653 = vmatprep.subr.mxu0 0.0
    %654 = vmatpush1.msra.mxu0 0.0
    %655 = vmatprep.subr.mxu0 0.0
    %656 = vmatpush1.msra.mxu0 0.0
    %657 = vmatprep.subr.mxu0 0.0
    %658 = vmatpush1.msra.mxu0 0.0
    %659 = vmatprep.subr.mxu0 0.0
    %660 = vmatpush1.msra.mxu0 0.0
    %661 = vmatprep.subr.mxu0 0.0
    %662 = vmatpush1.msra.mxu0 0.0
    %663 = vmatprep.subr.mxu0 0.0
    %664 = vmatpush1.msra.mxu0 0.0
    %665 = vmatprep.subr.mxu0 0.0
    %666 = vmatpush1.msra.mxu0 0.0
    %667 = vmatprep.subr.mxu0 0.0
    %668 = vmatpush1.msra.mxu0 0.0
    %669 = vmatprep.subr.mxu0 0.0
    %670 = vmatpush1.msra.mxu0 0.0
    %671 = vmatprep.subr.mxu0 0.0
    %672 = vmatpush1.msra.mxu0 0.0
    %673 = vmatprep.subr.mxu0 0.0
    %674 = vmatpush1.msra.mxu0 0.0
    %675 = vmatprep.subr.mxu0 0.0
    %676 = vmatpush1.msra.mxu0 0.0
    %677 = vmatprep.subr.mxu0 0.0
    %678 = vmatpush1.msra.mxu0 0.0
    %679 = vmatprep.subr.mxu0 0.0
    %680 = vmatpush1.msra.mxu0 0.0
    %681 = vmatprep.subr.mxu0 0.0
    %682 = vmatpush1.msra.mxu0 0.0
    %683 = vmatprep.subr.mxu0 0.0
    %684 = vmatpush1.msra.mxu0 0.0
    %685 = vmatprep.subr.mxu0 0.0
    %686 = vmatpush1.msra.mxu0 0.0
    %687 = vmatprep.subr.mxu0 0.0
    %688 = vmatpush1.msra.mxu0 0.0
    %689 = vmatprep.subr.mxu0 0.0
    %690 = vmatpush1.msra.mxu0 0.0
    %691 = vmatprep.mubr.f32.mxu0 0.0
    %692 = vmatmul.mubr.f32.gmra.mrb[0].mxu0 %v625
    %v693 = vpop.f32.mrb[0].mxu0
    %v694 = vadd.f32 0.0, %v693
    %v695 = vpop.f32.mrb[0].mxu0
    %696 = vdwg.mxu0
    %v697 = vadd.f32 %v238, %v694
    %v698 = vtanh.pop %v697
    %v700 = vsel %vm248, %v698, 0
    %702 = vmatprep.subr.mxu0 0.0
    %703 = vmatpush1.msra.mxu0 %v62
    %704 = vmatprep.subr.mxu0 0.0
    %705 = vmatpush1.msra.mxu0 %v63
    %706 = vmatprep.subr.mxu0 0.0
    %707 = vmatpush1.msra.mxu0 %v64
    %708 = vmatprep.subr.mxu0 0.0
    %709 = vmatpush1.msra.mxu0 %v65
    %710 = vmatprep.subr.mxu0 0.0
    %711 = vmatpush1.msra.mxu0 0.0
    %712 = vmatprep.subr.mxu0 0.0
    %713 = vmatpush1.msra.mxu0 0.0
    %714 = vmatprep.subr.mxu0 0.0
    %715 = vmatpush1.msra.mxu0 0.0
    %716 = vmatprep.subr.mxu0 0.0
    %717 = vmatpush1.msra.mxu0 0.0
    %718 = vmatprep.subr.mxu0 0.0
    %719 = vmatpush1.msra.mxu0 0.0
    %720 = vmatprep.subr.mxu0 0.0
    %721 = vmatpush1.msra.mxu0 0.0
    %722 = vmatprep.subr.mxu0 0.0
    %723 = vmatpush1.msra.mxu0 0.0
    %724 = vmatprep.subr.mxu0 0.0
    %725 = vmatpush1.msra.mxu0 0.0
    %726 = vmatprep.subr.mxu0 0.0
    %727 = vmatpush1.msra.mxu0 0.0
    %728 = vmatprep.subr.mxu0 0.0
    %729 = vmatpush1.msra.mxu0 0.0
    %730 = vmatprep.subr.mxu0 0.0
    %731 = vmatpush1.msra.mxu0 0.0
    %732 = vmatprep.subr.mxu0 0.0
    %733 = vmatpush1.msra.mxu0 0.0
    %734 = vmatprep.subr.mxu0 0.0
    %735 = vmatpush1.msra.mxu0 0.0
    %736 = vmatprep.subr.mxu0 0.0
    %737 = vmatpush1.msra.mxu0 0.0
    %738 = vmatprep.subr.mxu0 0.0
    %739 = vmatpush1.msra.mxu0 0.0
    %740 = vmatprep.subr.mxu0 0.0
    %741 = vmatpush1.msra.mxu0 0.0
    %742 = vmatprep.subr.mxu0 0.0
    %743 = vmatpush1.msra.mxu0 0.0
    %744 = vmatprep.subr.mxu0 0.0
    %745 = vmatpush1.msra.mxu0 0.0
    %746 = vmatprep.subr.mxu0 0.0
    %747 = vmatpush1.msra.mxu0 0.0
    %748 = vmatprep.subr.mxu0 0.0
    %749 = vmatpush1.msra.mxu0 0.0
    %750 = vmatprep.subr.mxu0 0.0
    %751 = vmatpush1.msra.mxu0 0.0
    %752 = vmatprep.subr.mxu0 0.0
    %753 = vmatpush1.msra.mxu0 0.0
    %754 = vmatprep.subr.mxu0 0.0
    %755 = vmatpush1.msra.mxu0 0.0
    %756 = vmatprep.subr.mxu0 0.0
    %757 = vmatpush1.msra.mxu0 0.0
    %758 = vmatprep.subr.mxu0 0.0
    %759 = vmatpush1.msra.mxu0 0.0
    %760 = vmatprep.subr.mxu0 0.0
    %761 = vmatpush1.msra.mxu0 0.0
    %762 = vmatprep.subr.mxu0 0.0
    %763 = vmatpush1.msra.mxu0 0.0
    %764 = vmatprep.subr.mxu0 0.0
    %765 = vmatpush1.msra.mxu0 0.0
    %766 = vmatprep.mubr.f32.mxu0 0.0
    %767 = vmatmul.mubr.f32.gmra.mrb[0].mxu0 %v700
    %v768 = vpop.f32.mrb[0].mxu0
    %v769 = vadd.f32 0.0, %v768
    %v770 = vpop.f32.mrb[0].mxu0
    %771 = vdwg.mxu0
    %v772 = vadd.f32 %v237, %v769
    %v773 = vtanh.pop %v772
    %v775 = vsel %vm248, %v773, 0
    %777 = vmatprep.subr.mxu0 0.0
    %778 = vmatpush1.msra.mxu0 %v62
    %779 = vmatprep.subr.mxu0 0.0
    %780 = vmatpush1.msra.mxu0 %v63
    %781 = vmatprep.subr.mxu0 0.0
    %782 = vmatpush1.msra.mxu0 %v64
    %783 = vmatprep.subr.mxu0 0.0
    %784 = vmatpush1.msra.mxu0 %v65
    %785 = vmatprep.subr.mxu0 0.0
    %786 = vmatpush1.msra.mxu0 0.0
    %787 = vmatprep.subr.mxu0 0.0
    %788 = vmatpush1.msra.mxu0 0.0
    %789 = vmatprep.subr.mxu0 0.0
    %790 = vmatpush1.msra.mxu0 0.0
    %791 = vmatprep.subr.mxu0 0.0
    %792 = vmatpush1.msra.mxu0 0.0
    %793 = vmatprep.subr.mxu0 0.0
    %794 = vmatpush1.msra.mxu0 0.0
    %795 = vmatprep.subr.mxu0 0.0
    %796 = vmatpush1.msra.mxu0 0.0
    %797 = vmatprep.subr.mxu0 0.0
    %798 = vmatpush1.msra.mxu0 0.0
    %799 = vmatprep.subr.mxu0 0.0
    %800 = vmatpush1.msra.mxu0 0.0
    %801 = vmatprep.subr.mxu0 0.0
    %802 = vmatpush1.msra.mxu0 0.0
    %803 = vmatprep.subr.mxu0 0.0
    %804 = vmatpush1.msra.mxu0 0.0
    %805 = vmatprep.subr.mxu0 0.0
    %806 = vmatpush1.msra.mxu0 0.0
    %807 = vmatprep.subr.mxu0 0.0
    %808 = vmatpush1.msra.mxu0 0.0
    %809 = vmatprep.subr.mxu0 0.0
    %810 = vmatpush1.msra.mxu0 0.0
    %811 = vmatprep.subr.mxu0 0.0
    %812 = vmatpush1.msra.mxu0 0.0
    %813 = vmatprep.subr.mxu0 0.0
    %814 = vmatpush1.msra.mxu0 0.0
    %815 = vmatprep.subr.mxu0 0.0
    %816 = vmatpush1.msra.mxu0 0.0
    %817 = vmatprep.subr.mxu0 0.0
    %818 = vmatpush1.msra.mxu0 0.0
    %819 = vmatprep.subr.mxu0 0.0
    %820 = vmatpush1.msra.mxu0 0.0
    %821 = vmatprep.subr.mxu0 0.0
    %822 = vmatpush1.msra.mxu0 0.0
    %823 = vmatprep.subr.mxu0 0.0
    %824 = vmatpush1.msra.mxu0 0.0
    %825 = vmatprep.subr.mxu0 0.0
    %826 = vmatpush1.msra.mxu0 0.0
    %827 = vmatprep.subr.mxu0 0.0
    %828 = vmatpush1.msra.mxu0 0.0
    %829 = vmatprep.subr.mxu0 0.0
    %830 = vmatpush1.msra.mxu0 0.0
    %831 = vmatprep.subr.mxu0 0.0
    %832 = vmatpush1.msra.mxu0 0.0
    %833 = vmatprep.subr.mxu0 0.0
    %834 = vmatpush1.msra.mxu0 0.0
    %835 = vmatprep.subr.mxu0 0.0
    %836 = vmatpush1.msra.mxu0 0.0
    %837 = vmatprep.subr.mxu0 0.0
    %838 = vmatpush1.msra.mxu0 0.0
    %839 = vmatprep.subr.mxu0 0.0
    %840 = vmatpush1.msra.mxu0 0.0
    %841 = vmatprep.mubr.f32.mxu0 0.0
    %842 = vmatmul.mubr.f32.gmra.mrb[0].mxu0 %v775
    %v843 = vpop.f32.mrb[0].mxu0
    %v844 = vadd.f32 0.0, %v843
    %v845 = vpop.f32.mrb[0].mxu0
    %846 = vdwg.mxu0
    %v847 = vadd.f32 %v239, %v844
    %v848 = vtanh.pop %v847
    %v849 = vld [vmem:[%s4] sm:$0xff]
    %v850 = vld [vmem:[%s4 + $0x8] sm:$0xff]
    %v851 = vld [vmem:[%s4 + $0x10] sm:$0xff]
    %v852 = vld [vmem:[%s4 + $0x18] sm:$0xff]
    %v853 = vld [vmem:[%s5] sm:$0x1]
    %v855 = vlaneseq
    %v856 = vshrl.u32 %v855, 7
    %v857 = vsub.s32 0, %v856
    %v858 = vrot.slane %v853, %v857
    %v861 = vsel %vm248, %v848, 0
    %863 = vmatprep.subr.mxu0 0.0
    %864 = vmatpush1.msra.mxu0 %v849
    %865 = vmatprep.subr.mxu0 0.0
    %866 = vmatpush1.msra.mxu0 %v850
    %867 = vmatprep.subr.mxu0 0.0
    %868 = vmatpush1.msra.mxu0 %v851
    %869 = vmatprep.subr.mxu0 0.0
    %870 = vmatpush1.msra.mxu0 %v852
    %871 = vmatprep.subr.mxu0 0.0
    %872 = vmatpush1.msra.mxu0 0.0
    %873 = vmatprep.subr.mxu0 0.0
    %874 = vmatpush1.msra.mxu0 0.0
    %875 = vmatprep.subr.mxu0 0.0
    %876 = vmatpush1.msra.mxu0 0.0
    %877 = vmatprep.subr.mxu0 0.0
    %878 = vmatpush1.msra.mxu0 0.0
    %879 = vmatprep.subr.mxu0 0.0
    %880 = vmatpush1.msra.mxu0 0.0
    %881 = vmatprep.subr.mxu0 0.0
    %882 = vmatpush1.msra.mxu0 0.0
    %883 = vmatprep.subr.mxu0 0.0
    %884 = vmatpush1.msra.mxu0 0.0
    %885 = vmatprep.subr.mxu0 0.0
    %886 = vmatpush1.msra.mxu0 0.0
    %887 = vmatprep.subr.mxu0 0.0
    %888 = vmatpush1.msra.mxu0 0.0
    %889 = vmatprep.subr.mxu0 0.0
    %890 = vmatpush1.msra.mxu0 0.0
    %891 = vmatprep.subr.mxu0 0.0
    %892 = vmatpush1.msra.mxu0 0.0
    %893 = vmatprep.subr.mxu0 0.0
    %894 = vmatpush1.msra.mxu0 0.0
    %895 = vmatprep.subr.mxu0 0.0
    %896 = vmatpush1.msra.mxu0 0.0
    %897 = vmatprep.subr.mxu0 0.0
    %898 = vmatpush1.msra.mxu0 0.0
    %899 = vmatprep.subr.mxu0 0.0
    %900 = vmatpush1.msra.mxu0 0.0
    %901 = vmatprep.subr.mxu0 0.0
    %902 = vmatpush1.msra.mxu0 0.0
    %903 = vmatprep.subr.mxu0 0.0
    %904 = vmatpush1.msra.mxu0 0.0
    %905 = vmatprep.subr.mxu0 0.0
    %906 = vmatpush1.msra.mxu0 0.0
    %907 = vmatprep.subr.mxu0 0.0
    %908 = vmatpush1.msra.mxu0 0.0
    %909 = vmatprep.subr.mxu0 0.0
    %910 = vmatpush1.msra.mxu0 0.0
    %911 = vmatprep.subr.mxu0 0.0
    %912 = vmatpush1.msra.mxu0 0.0
    %913 = vmatprep.subr.mxu0 0.0
    %914 = vmatpush1.msra.mxu0 0.0
    %915 = vmatprep.subr.mxu0 0.0
    %916 = vmatpush1.msra.mxu0 0.0
    %917 = vmatprep.subr.mxu0 0.0
    %918 = vmatpush1.msra.mxu0 0.0
    %919 = vmatprep.subr.mxu0 0.0
    %920 = vmatpush1.msra.mxu0 0.0
    %921 = vmatprep.subr.mxu0 0.0
    %922 = vmatpush1.msra.mxu0 0.0
    %923 = vmatprep.subr.mxu0 0.0
    %924 = vmatpush1.msra.mxu0 0.0
    %925 = vmatprep.subr.mxu0 0.0
    %926 = vmatpush1.msra.mxu0 0.0
    %927 = vmatprep.mubr.f32.mxu0 0.0
    %928 = vmatmul.mubr.f32.gmra.mrb[0].mxu0 %v861
    %v929 = vpop.f32.mrb[0].mxu0
    %v930 = vadd.f32 %v858, %v929
    %v931 = vpop.f32.mrb[0].mxu0
    %932 = vdwg.mxu0
    %vm933 = vcmask 58368
    %934 = vst.msk [vmem:[#allocation7] sm:$0x3] %vm933, %v930
    // Predicated region
    $region34: #{tpu_custom_call.1} parent=1 // pred_check
      _
    $region35: #{tpu_custom_call.1} parent=1 // pred_check_branch
      %936 = sbr.rel (0) target = $region37
    $region36: #{tpu_custom_call.1} parent=1 // pred_region
      %s938 = ssub.s32 32, 32
      %939 = vsyncadd [#allocation4], %s938
      %s941 = sshll.u32 [#allocation7], 4
      %s942 = int_to_ptr.vmem [resolvable:$true] %s941
      %944 = dma.vmem_to_hbm [thread:$0]  %s942, 32, %s6, [#allocation4]
    $region37: #{tpu_custom_call.1} parent=1 // pred_fallthru
      _
    // Predicated region
    $region38: #{tpu_custom_call.1} parent=1 // pred_check
      _
    $region39: #{tpu_custom_call.1} parent=1 // pred_check_branch
      %946 = sbr.rel (0) target = $region41
    $region40: #{tpu_custom_call.1} parent=1 // pred_region
      %947 = dma.done [#allocation4], 32
    $region41: #{tpu_custom_call.1} parent=1 // pred_fallthru
      _
    %948 = vsyncpa [#allocation3], 1
    %949 = vsyncpa [#allocation6], 1
    %950 = vsyncpa [#allocation4], 1

</llo_original>
